<compile_context>
chip_gen: v7x
topology: tpu7x:2x2x1
jax: 0.10.0
libtpu: 0.0.40
codegen_flags: <defaults>
</compile_context>

<pallas_src>
import functools

import numpy as np
import jax
import jax.numpy as jnp
from jax.experimental import pallas as pl
from jax.experimental.pallas import tpu as pltpu


# --------------------------------------------------------------------------
# kernel
# --------------------------------------------------------------------------
def _resblock_kernel(x_ref, s_ref, a1_ref, a2_ref, asc_ref, b_ref, o_ref):
    # x_ref : (block_n, H, W*Cin)   activations, (W, Cin) fused on lanes, f32
    # s_ref : (2, M, M)             0/1 row-shift matrices (M = block_n*H), bf16
    #                               s_ref[0]: row h <- row h-1 (0 at image top)
    #                               s_ref[1]: row h <- row h+1 (0 at image bottom)
    # a1_ref: (3, W*Cin,  W*Cout)   banded conv1 weights, one per kh, bf16
    # a2_ref: (3, W*Cout, W*Cout)   banded conv2 weights, one per kh, bf16
    # asc_ref:(W*Cin, W*Cout)       block-diagonal 1x1 shortcut weight, bf16
    # b_ref : (2, W*Cout)           row0 = b1 tiled, row1 = (b2 + bsc) tiled, f32
    # o_ref : (block_n, H, W*Cout)  output, lane-dense last dim
    nb, h_img, wci = x_ref.shape
    wco = o_ref.shape[-1]
    m = nb * h_img

    def conv3x3(vm, a_ref):
        # vm: (M, K) bf16 activation rows.  Row r <-> (image r // H, row r % H).
        # kh row-shifts via 0/1 shift matrices (exact; values stay bf16-valued).
        dn = jnp.dot(s_ref[0], vm,
                     preferred_element_type=jnp.float32).astype(jnp.bfloat16)
        up = jnp.dot(s_ref[1], vm,
                     preferred_element_type=jnp.float32).astype(jnp.bfloat16)
        acc = jnp.dot(vm, a_ref[1], preferred_element_type=jnp.float32)
        acc += jnp.dot(dn, a_ref[0], preferred_element_type=jnp.float32)
        acc += jnp.dot(up, a_ref[2], preferred_element_type=jnp.float32)
        return acc                                   # (M, W*Cout) f32

    xm = x_ref[...].reshape(m, wci).astype(jnp.bfloat16)   # one cast, reused
    b = b_ref[...]                                          # (2, W*Cout) f32

    # conv1 -> bias -> ReLU   (epilogue in f32)
    h1 = jnp.maximum(conv3x3(xm, a1_ref) + b[0:1, :], 0.0)

    # conv2 + 1x1 shortcut + (b2 + bsc) -> ReLU
    out = conv3x3(h1.astype(jnp.bfloat16), a2_ref)
    out += jnp.dot(xm, asc_ref[...], preferred_element_type=jnp.float32)
    out = jnp.maximum(out + b[1:2, :], 0.0)

    o_ref[...] = out.reshape(nb, h_img, wco).astype(o_ref.dtype)


# --------------------------------------------------------------------------
# wrapper-side layout plumbing (tiny, weights only — no activation HBM roundtrip)
# --------------------------------------------------------------------------
def _banded_conv_weights(w_hwio, width):
    """Fold the kw taps of a 3x3 'same' conv into banded (W*Ci, W*Co) matrices.

    A[kh][(w+kw-1)*Ci + ci, w*Co + co] = w_hwio[kh, kw, ci, co] for valid w+kw-1.
    Multiplying fused activation rows (.., W*Ci) by A[kh] performs all kw taps
    (including the width zero-padding) of that kh in a single matmul.
    """
    kh_n, kw_n, ci, co = w_hwio.shape
    mats = []
    for kh in range(kh_n):
        a = jnp.zeros((width * ci, width * co), w_hwio.dtype)
        for kw in range(kw_n):
            w_lo = max(0, 1 - kw)                 # first output col with valid input col
            w_hi = min(width, width + 1 - kw)     # one past the last valid output col
            nw = w_hi - w_lo
            if nw <= 0:
                continue
            blk = jnp.kron(jnp.eye(nw, dtype=w_hwio.dtype), w_hwio[kh, kw])
            r0 = (w_lo + kw - 1) * ci
            c0 = w_lo * co
            a = a.at[r0:r0 + nw * ci, c0:c0 + nw * co].add(blk)
        mats.append(a)
    return jnp.stack(mats)                         # (3, W*Ci, W*Co)


def _row_shift_matrices(block_n, height):
    """(2, M, M) 0/1 matrices shifting activation rows by -1 / +1 within each image."""
    m = block_n * height
    i = np.arange(m)
    in_img = i % height
    s_down = ((i[:, None] - 1) == i[None, :]) & (in_img[:, None] != 0)
    s_up = ((i[:, None] + 1) == i[None, :]) & (in_img[:, None] != height - 1)
    return jnp.asarray(np.stack([s_down, s_up]), dtype=jnp.bfloat16)


@functools.partial(jax.jit, static_argnames=("block_n",))
def resblock_pallas(x_nhwc, w1, b1, w2, b2, wsc, bsc, *, block_n=None):
    """x_nhwc: (N, H, W, Cin) f32; w1/w2 in HWIO; wsc: (Cin, Cout) 1x1 shortcut."""
    N, H, W, Cin = x_nhwc.shape
    Cout = w1.shape[-1]
    if block_n is None:
        # >=2 grid steps when possible (keeps both v7x TensorCores busy) while
        # still batching images per step to amortize the ~0.35us/step overhead.
        block_n = max(1, N // 2)
    assert N % block_n == 0, "pad the batch to a multiple of block_n"
    m = block_n * H
    wci, wco = W * Cin, W * Cout

    x_f = x_nhwc.reshape(N, H, wci)                        # fuse (W,Cin) on lanes: free
    a1 = _banded_conv_weights(w1, W).astype(jnp.bfloat16)   # (3, W*Cin,  W*Cout)
    a2 = _banded_conv_weights(w2, W).astype(jnp.bfloat16)   # (3, W*Cout, W*Cout)
    asc = jnp.kron(jnp.eye(W, dtype=wsc.dtype), wsc).astype(jnp.bfloat16)
    biases = jnp.stack([jnp.tile(b1, W), jnp.tile(b2 + bsc, W)])   # (2, W*Cout) f32
    s_shift = _row_shift_matrices(block_n, H)                      # (2, M, M) bf16

    out_f = pl.pallas_call(
        _resblock_kernel,
        out_shape=jax.ShapeDtypeStruct((N, H, wco), jnp.float32),
        grid_spec=pltpu.PrefetchScalarGridSpec(
            num_scalar_prefetch=0,
            grid=(N // block_n,),
            in_specs=[
                pl.BlockSpec((block_n, H, wci), lambda n: (n, 0, 0)),
                pl.BlockSpec((2, m, m), lambda n: (0, 0, 0)),
                pl.BlockSpec((3, wci, wco), lambda n: (0, 0, 0)),
                pl.BlockSpec((3, wco, wco), lambda n: (0, 0, 0)),
                pl.BlockSpec((wci, wco), lambda n: (0, 0)),
                pl.BlockSpec((2, wco), lambda n: (0, 0)),
            ],
            out_specs=pl.BlockSpec((block_n, H, wco), lambda n: (n, 0, 0)),
        ),
        compiler_params=pltpu.CompilerParams(
            dimension_semantics=("parallel",)),
    )(x_f, s_shift, a1, a2, asc, biases)

    return out_f.reshape(N, H, W, Cout)                    # free reshape back to NHWC


# --------------------------------------------------------------------------
# reference + test
# --------------------------------------------------------------------------
def _conv2d_ref(x, w, b, pad):
    y = jax.lax.conv_general_dilated(
        x, w, window_strides=(1, 1), padding=[(pad, pad), (pad, pad)],
        dimension_numbers=("NHWC", "HWIO", "NHWC"))
    return y + b


def resblock_ref(x, w1, b1, w2, b2, wsc_1x1, bsc):
    out = jax.nn.relu(_conv2d_ref(x, w1, b1, 1))
    out = _conv2d_ref(out, w2, b2, 1)
    residual = _conv2d_ref(x, wsc_1x1, bsc, 0)     # 1x1 shortcut (first_layer=True)
    return jax.nn.relu(out + residual)


if __name__ == "__main__":
    N, Cin, Cout, H, W = 2, 4, 8, 16, 16
    key = jax.random.PRNGKey(0)
    k = jax.random.split(key, 7)

    x = jax.random.normal(k[0], (N, H, W, Cin), jnp.float32)             # NHWC
    w1 = 0.1 * jax.random.normal(k[1], (3, 3, Cin, Cout), jnp.float32)   # HWIO
    b1 = 0.1 * jax.random.normal(k[2], (Cout,), jnp.float32)
    w2 = 0.1 * jax.random.normal(k[3], (3, 3, Cout, Cout), jnp.float32)
    b2 = 0.1 * jax.random.normal(k[4], (Cout,), jnp.float32)
    wsc_1x1 = 0.1 * jax.random.normal(k[5], (1, 1, Cin, Cout), jnp.float32)
    bsc = 0.1 * jax.random.normal(k[6], (Cout,), jnp.float32)
    wsc = wsc_1x1.reshape(Cin, Cout)        # 1x1 conv == per-pixel channel matmul

    out = resblock_pallas(x, w1, b1, w2, b2, wsc, bsc)
    out = jax.block_until_ready(out)

    ref = resblock_ref(x, w1, b1, w2, b2, wsc_1x1, bsc)
    assert out.shape == (N, H, W, Cout)
    # bf16 MXU operands (f32 accumulation) -> tolerance loosened vs pure-f32.
    err = float(jnp.max(jnp.abs(out - ref)))
    assert err < 5e-2, f"max abs err {err}"

    print("KERNEL_OK")
</pallas_src>

<mosaic_0001>
module attributes {stable_mosaic.version = 11 : i64} {
  func.func @_resblock_kernel(%arg0: i32, %arg1: memref<1x16x64xf32, #tpu.memory_space<vmem>>, %arg2: memref<2x16x16xbf16, #tpu.memory_space<vmem>>, %arg3: memref<3x64x128xbf16, #tpu.memory_space<vmem>>, %arg4: memref<3x128x128xbf16, #tpu.memory_space<vmem>>, %arg5: memref<64x128xbf16, #tpu.memory_space<vmem>>, %arg6: memref<2x128xf32, #tpu.memory_space<vmem>>, %arg7: memref<1x16x128xf32, #tpu.memory_space<vmem>>) attributes {dimension_semantics = [#tpu.dimension_semantics<parallel>], iteration_bounds = array<i64: 2>, scalar_prefetch = 0 : i64, scratch_operands = 0 : i64, tpu.core_type = #tpu.core_type<tc>, window_params = [{transform_indices = @transform_0, window_bounds = array<i64: 1, 16, 64>}, {pipeline_mode = #tpu.pipeline_mode<synchronous>, transform_indices = @transform_1, window_bounds = array<i64: 2, 16, 16>}, {pipeline_mode = #tpu.pipeline_mode<synchronous>, transform_indices = @transform_2, window_bounds = array<i64: 3, 64, 128>}, {pipeline_mode = #tpu.pipeline_mode<synchronous>, transform_indices = @transform_3, window_bounds = array<i64: 3, 128, 128>}, {pipeline_mode = #tpu.pipeline_mode<synchronous>, transform_indices = @transform_4, window_bounds = array<i64: 64, 128>}, {pipeline_mode = #tpu.pipeline_mode<synchronous>, transform_indices = @transform_5, window_bounds = array<i64: 2, 128>}, {transform_indices = @transform_6, window_bounds = array<i64: 1, 16, 128>}]} {
    %c0 = arith.constant 0 : index
    %c0_0 = arith.constant 0 : index
    %c0_1 = arith.constant 0 : index
    %0 = vector.load %arg1[%c0, %c0_0, %c0_1] : memref<1x16x64xf32, #tpu.memory_space<vmem>>, vector<1x16x64xf32>
    %1 = vector.shape_cast %0 : vector<1x16x64xf32> to vector<16x64xf32>
    %2 = arith.truncf %1 : vector<16x64xf32> to vector<16x64xbf16>
    %c0_2 = arith.constant 0 : index
    %c0_3 = arith.constant 0 : index
    %3 = vector.load %arg6[%c0_2, %c0_3] : memref<2x128xf32, #tpu.memory_space<vmem>>, vector<2x128xf32>
    %c0_4 = arith.constant 0 : index
    %c0_5 = arith.constant 0 : index
    %c0_6 = arith.constant 0 : index
    %4 = vector.load %arg2[%c0_4, %c0_5, %c0_6] : memref<2x16x16xbf16, #tpu.memory_space<vmem>>, vector<1x16x16xbf16>
    %5 = vector.shape_cast %4 : vector<1x16x16xbf16> to vector<16x16xbf16>
    %cst = arith.constant dense<0.000000e+00> : vector<16x64xf32>
    %6 = tpu.matmul %5, %2, %cst {dimension_numbers = #tpu.dot_dimension_numbers<[1], [0], [0], [1], [0, 0, 1, 1], [], []>} : vector<16x16xbf16>, vector<16x64xbf16>, vector<16x64xf32> -> vector<16x64xf32>
    %7 = arith.truncf %6 : vector<16x64xf32> to vector<16x64xbf16>
    %c1 = arith.constant 1 : index
    %c0_7 = arith.constant 0 : index
    %c0_8 = arith.constant 0 : index
    %8 = vector.load %arg2[%c1, %c0_7, %c0_8] : memref<2x16x16xbf16, #tpu.memory_space<vmem>>, vector<1x16x16xbf16>
    %9 = vector.shape_cast %8 : vector<1x16x16xbf16> to vector<16x16xbf16>
    %cst_9 = arith.constant dense<0.000000e+00> : vector<16x64xf32>
    %10 = tpu.matmul %9, %2, %cst_9 {dimension_numbers = #tpu.dot_dimension_numbers<[1], [0], [0], [1], [0, 0, 1, 1], [], []>} : vector<16x16xbf16>, vector<16x64xbf16>, vector<16x64xf32> -> vector<16x64xf32>
    %11 = arith.truncf %10 : vector<16x64xf32> to vector<16x64xbf16>
    %c1_10 = arith.constant 1 : index
    %c0_11 = arith.constant 0 : index
    %c0_12 = arith.constant 0 : index
    %12 = vector.load %arg3[%c1_10, %c0_11, %c0_12] : memref<3x64x128xbf16, #tpu.memory_space<vmem>>, vector<1x64x128xbf16>
    %13 = vector.shape_cast %12 : vector<1x64x128xbf16> to vector<64x128xbf16>
    %cst_13 = arith.constant dense<0.000000e+00> : vector<16x128xf32>
    %14 = tpu.matmul %2, %13, %cst_13 {dimension_numbers = #tpu.dot_dimension_numbers<[1], [0], [0], [1], [0, 0, 1, 1], [], []>} : vector<16x64xbf16>, vector<64x128xbf16>, vector<16x128xf32> -> vector<16x128xf32>
    %c0_14 = arith.constant 0 : index
    %c0_15 = arith.constant 0 : index
    %c0_16 = arith.constant 0 : index
    %15 = vector.load %arg3[%c0_14, %c0_15, %c0_16] : memref<3x64x128xbf16, #tpu.memory_space<vmem>>, vector<1x64x128xbf16>
    %16 = vector.shape_cast %15 : vector<1x64x128xbf16> to vector<64x128xbf16>
    %cst_17 = arith.constant dense<0.000000e+00> : vector<16x128xf32>
    %17 = tpu.matmul %7, %16, %cst_17 {dimension_numbers = #tpu.dot_dimension_numbers<[1], [0], [0], [1], [0, 0, 1, 1], [], []>} : vector<16x64xbf16>, vector<64x128xbf16>, vector<16x128xf32> -> vector<16x128xf32>
    %18 = arith.addf %14, %17 : vector<16x128xf32>
    %c2 = arith.constant 2 : index
    %c0_18 = arith.constant 0 : index
    %c0_19 = arith.constant 0 : index
    %19 = vector.load %arg3[%c2, %c0_18, %c0_19] : memref<3x64x128xbf16, #tpu.memory_space<vmem>>, vector<1x64x128xbf16>
    %20 = vector.shape_cast %19 : vector<1x64x128xbf16> to vector<64x128xbf16>
    %cst_20 = arith.constant dense<0.000000e+00> : vector<16x128xf32>
    %21 = tpu.matmul %11, %20, %cst_20 {dimension_numbers = #tpu.dot_dimension_numbers<[1], [0], [0], [1], [0, 0, 1, 1], [], []>} : vector<16x64xbf16>, vector<64x128xbf16>, vector<16x128xf32> -> vector<16x128xf32>
    %22 = arith.addf %18, %21 : vector<16x128xf32>
    %23 = vector.extract_strided_slice %3 {offsets = [0, 0], sizes = [1, 128], strides = [1, 1]} : vector<2x128xf32> to vector<1x128xf32>
    %24 = vector.broadcast %23 : vector<1x128xf32> to vector<16x128xf32>
    %25 = arith.addf %22, %24 : vector<16x128xf32>
    %cst_21 = arith.constant 0.000000e+00 : f32
    %26 = vector.broadcast %cst_21 : f32 to vector<16x128xf32>
    %27 = arith.maximumf %25, %26 : vector<16x128xf32>
    %28 = arith.truncf %27 : vector<16x128xf32> to vector<16x128xbf16>
    %c0_22 = arith.constant 0 : index
    %c0_23 = arith.constant 0 : index
    %c0_24 = arith.constant 0 : index
    %29 = vector.load %arg2[%c0_22, %c0_23, %c0_24] : memref<2x16x16xbf16, #tpu.memory_space<vmem>>, vector<1x16x16xbf16>
    %30 = vector.shape_cast %29 : vector<1x16x16xbf16> to vector<16x16xbf16>
    %cst_25 = arith.constant dense<0.000000e+00> : vector<16x128xf32>
    %31 = tpu.matmul %30, %28, %cst_25 {dimension_numbers = #tpu.dot_dimension_numbers<[1], [0], [0], [1], [0, 0, 1, 1], [], []>} : vector<16x16xbf16>, vector<16x128xbf16>, vector<16x128xf32> -> vector<16x128xf32>
    %32 = arith.truncf %31 : vector<16x128xf32> to vector<16x128xbf16>
    %c1_26 = arith.constant 1 : index
    %c0_27 = arith.constant 0 : index
    %c0_28 = arith.constant 0 : index
    %33 = vector.load %arg2[%c1_26, %c0_27, %c0_28] : memref<2x16x16xbf16, #tpu.memory_space<vmem>>, vector<1x16x16xbf16>
    %34 = vector.shape_cast %33 : vector<1x16x16xbf16> to vector<16x16xbf16>
    %cst_29 = arith.constant dense<0.000000e+00> : vector<16x128xf32>
    %35 = tpu.matmul %34, %28, %cst_29 {dimension_numbers = #tpu.dot_dimension_numbers<[1], [0], [0], [1], [0, 0, 1, 1], [], []>} : vector<16x16xbf16>, vector<16x128xbf16>, vector<16x128xf32> -> vector<16x128xf32>
    %36 = arith.truncf %35 : vector<16x128xf32> to vector<16x128xbf16>
    %c1_30 = arith.constant 1 : index
    %c0_31 = arith.constant 0 : index
    %c0_32 = arith.constant 0 : index
    %37 = vector.load %arg4[%c1_30, %c0_31, %c0_32] : memref<3x128x128xbf16, #tpu.memory_space<vmem>>, vector<1x128x128xbf16>
    %38 = vector.shape_cast %37 : vector<1x128x128xbf16> to vector<128x128xbf16>
    %cst_33 = arith.constant dense<0.000000e+00> : vector<16x128xf32>
    %39 = tpu.matmul %28, %38, %cst_33 {dimension_numbers = #tpu.dot_dimension_numbers<[1], [0], [0], [1], [0, 0, 1, 1], [], []>} : vector<16x128xbf16>, vector<128x128xbf16>, vector<16x128xf32> -> vector<16x128xf32>
    %c0_34 = arith.constant 0 : index
    %c0_35 = arith.constant 0 : index
    %c0_36 = arith.constant 0 : index
    %40 = vector.load %arg4[%c0_34, %c0_35, %c0_36] : memref<3x128x128xbf16, #tpu.memory_space<vmem>>, vector<1x128x128xbf16>
    %41 = vector.shape_cast %40 : vector<1x128x128xbf16> to vector<128x128xbf16>
    %cst_37 = arith.constant dense<0.000000e+00> : vector<16x128xf32>
    %42 = tpu.matmul %32, %41, %cst_37 {dimension_numbers = #tpu.dot_dimension_numbers<[1], [0], [0], [1], [0, 0, 1, 1], [], []>} : vector<16x128xbf16>, vector<128x128xbf16>, vector<16x128xf32> -> vector<16x128xf32>
    %43 = arith.addf %39, %42 : vector<16x128xf32>
    %c2_38 = arith.constant 2 : index
    %c0_39 = arith.constant 0 : index
    %c0_40 = arith.constant 0 : index
    %44 = vector.load %arg4[%c2_38, %c0_39, %c0_40] : memref<3x128x128xbf16, #tpu.memory_space<vmem>>, vector<1x128x128xbf16>
    %45 = vector.shape_cast %44 : vector<1x128x128xbf16> to vector<128x128xbf16>
    %cst_41 = arith.constant dense<0.000000e+00> : vector<16x128xf32>
    %46 = tpu.matmul %36, %45, %cst_41 {dimension_numbers = #tpu.dot_dimension_numbers<[1], [0], [0], [1], [0, 0, 1, 1], [], []>} : vector<16x128xbf16>, vector<128x128xbf16>, vector<16x128xf32> -> vector<16x128xf32>
    %47 = arith.addf %43, %46 : vector<16x128xf32>
    %c0_42 = arith.constant 0 : index
    %c0_43 = arith.constant 0 : index
    %48 = vector.load %arg5[%c0_42, %c0_43] : memref<64x128xbf16, #tpu.memory_space<vmem>>, vector<64x128xbf16>
    %cst_44 = arith.constant dense<0.000000e+00> : vector<16x128xf32>
    %49 = tpu.matmul %2, %48, %cst_44 {dimension_numbers = #tpu.dot_dimension_numbers<[1], [0], [0], [1], [0, 0, 1, 1], [], []>} : vector<16x64xbf16>, vector<64x128xbf16>, vector<16x128xf32> -> vector<16x128xf32>
    %50 = arith.addf %47, %49 : vector<16x128xf32>
    %51 = vector.extract_strided_slice %3 {offsets = [1, 0], sizes = [1, 128], strides = [1, 1]} : vector<2x128xf32> to vector<1x128xf32>
    %52 = vector.broadcast %51 : vector<1x128xf32> to vector<16x128xf32>
    %53 = arith.addf %50, %52 : vector<16x128xf32>
    %cst_45 = arith.constant 0.000000e+00 : f32
    %54 = vector.broadcast %cst_45 : f32 to vector<16x128xf32>
    %55 = arith.maximumf %53, %54 : vector<16x128xf32>
    %56 = vector.shape_cast %55 : vector<16x128xf32> to vector<1x16x128xf32>
    %c0_46 = arith.constant 0 : index
    %c0_47 = arith.constant 0 : index
    %c0_48 = arith.constant 0 : index
    %57 = vector.load %arg7[%c0_46, %c0_47, %c0_48] : memref<1x16x128xf32, #tpu.memory_space<vmem>>, vector<1x16x128xf32>
    tpu.vector_store %arg7[%c0_46, %c0_47, %c0_48], %56 {strides = array<i32>} : memref<1x16x128xf32, #tpu.memory_space<vmem>>, vector<1x16x128xf32>,
    return
  }
  func.func @transform_0(%arg0: i32) -> (i32, i32, i32) {
    %c0_i32 = arith.constant 0 : i32
    %c0_i32_0 = arith.constant 0 : i32
    %c0_i32_1 = arith.constant 0 : i32
    return %arg0, %c0_i32, %c0_i32_0 : i32, i32, i32
  }
  func.func @transform_1(%arg0: i32) -> (i32, i32, i32) {
    %c0_i32 = arith.constant 0 : i32
    %c0_i32_0 = arith.constant 0 : i32
    %c0_i32_1 = arith.constant 0 : i32
    %c0_i32_2 = arith.constant 0 : i32
    return %c0_i32, %c0_i32_0, %c0_i32_1 : i32, i32, i32
  }
  func.func @transform_2(%arg0: i32) -> (i32, i32, i32) {
    %c0_i32 = arith.constant 0 : i32
    %c0_i32_0 = arith.constant 0 : i32
    %c0_i32_1 = arith.constant 0 : i32
    %c0_i32_2 = arith.constant 0 : i32
    return %c0_i32, %c0_i32_0, %c0_i32_1 : i32, i32, i32
  }
  func.func @transform_3(%arg0: i32) -> (i32, i32, i32) {
    %c0_i32 = arith.constant 0 : i32
    %c0_i32_0 = arith.constant 0 : i32
    %c0_i32_1 = arith.constant 0 : i32
    %c0_i32_2 = arith.constant 0 : i32
    return %c0_i32, %c0_i32_0, %c0_i32_1 : i32, i32, i32
  }
  func.func @transform_4(%arg0: i32) -> (i32, i32) {
    %c0_i32 = arith.constant 0 : i32
    %c0_i32_0 = arith.constant 0 : i32
    %c0_i32_1 = arith.constant 0 : i32
    return %c0_i32, %c0_i32_0 : i32, i32
  }
  func.func @transform_5(%arg0: i32) -> (i32, i32) {
    %c0_i32 = arith.constant 0 : i32
    %c0_i32_0 = arith.constant 0 : i32
    %c0_i32_1 = arith.constant 0 : i32
    return %c0_i32, %c0_i32_0 : i32, i32
  }
  func.func @transform_6(%arg0: i32) -> (i32, i32, i32) {
    %c0_i32 = arith.constant 0 : i32
    %c0_i32_0 = arith.constant 0 : i32
    %c0_i32_1 = arith.constant 0 : i32
    return %arg0, %c0_i32, %c0_i32_0 : i32, i32, i32
  }
}

</mosaic_0001>

<llo_original>
// kernel: tile.17
$region0: #{tile.17}
  #allocation0 [shape = 's32[1]{0}', space=sflag, size = 0x4, scoped, tag = 'scoped memory for tile.17']
  %s0 = inlined_call_operand.vmem [shape: f32[8], index: 0, kind: input, shape index: {}]
  %s1 = inlined_call_operand.vmem [shape: f32[16,8], index: 1, kind: output, shape index: {}]
  // Predicated region
  $region2: #{tile.17} parent=0 // pred_check
    _
  $region3: #{tile.17} parent=0 // pred_check_branch
    %3 = sbr.rel (0) target = $region5
  $region4: #{tile.17} parent=0 // pred_region
    _
  $region5: #{tile.17} parent=0 // pred_fallthru
    _
  %v4 = vld [vmem:[%s0] ss:$0 sm:$0xff]
  %5 = vst [vmem:[%s1] sm:$0xff] %v4
  %s6 = scalar_lea.vmem %s1, 8
  %7 = vst [vmem:[%s6] sm:$0xff] %v4

// kernel: tile.19
$region0: #{tile.19}
  %s0 = inlined_call_operand.vmem [shape: f32[16,8], index: 0, kind: input, shape index: {}]
  %s1 = inlined_call_operand.vmem [shape: f32[1,128], index: 1, kind: output, shape index: {}]
  $region1: #{tile.19} parent=0
    #allocation0 [shape = 'u8[4096]{0}', space=vmem, size = 0x1000, scoped, tag = 'scoped mem for output reshape']
    %v2 = vld [vmem:[%s0] sm:$0x1]
    %vm3 = vcmask 64512
    %4 = vst.msk [vmem:[#allocation0] sm:$0x1] %vm3, %v2
    %s5 = scalar_lea.vmem %s0, 15
    %v6 = vld [vmem:[%s5] sm:$0x1]
    %7 = vrot.lane.b32.xlu0 %v6, 120
    %v8 = vpop.permute.xlu0 %7
    %vm9 = vcmask 1048512
    %10 = vst.msk [vmem:[#allocation0] sm:$0x1] %vm9, %v8
    %s11 = scalar_lea.vmem %s0, 14
    %v12 = vld [vmem:[%s11] sm:$0x1]
    %13 = vrot.lane.b32.xlu0 %v12, 112
    %v14 = vpop.permute.xlu0 %13
    %vm15 = vcmask 982912
    %16 = vst.msk [vmem:[#allocation0] sm:$0x1] %vm15, %v14
    %s17 = scalar_lea.vmem %s0, 13
    %v18 = vld [vmem:[%s17] sm:$0x1]
    %19 = vrot.lane.b32.xlu0 %v18, 104
    %v20 = vpop.permute.xlu0 %19
    %vm21 = vcmask 917312
    %22 = vst.msk [vmem:[#allocation0] sm:$0x1] %vm21, %v20
    %s23 = scalar_lea.vmem %s0, 12
    %v24 = vld [vmem:[%s23] sm:$0x1]
    %25 = vrot.lane.b32.xlu0 %v24, 96
    %v26 = vpop.permute.xlu0 %25
    %vm27 = vcmask 851712
    %28 = vst.msk [vmem:[#allocation0] sm:$0x1] %vm27, %v26
    %s29 = scalar_lea.vmem %s0, 11
    %v30 = vld [vmem:[%s29] sm:$0x1]
    %31 = vrot.lane.b32.xlu0 %v30, 88
    %v32 = vpop.permute.xlu0 %31
    %vm33 = vcmask 786112
    %34 = vst.msk [vmem:[#allocation0] sm:$0x1] %vm33, %v32
    %s35 = scalar_lea.vmem %s0, 10
    %v36 = vld [vmem:[%s35] sm:$0x1]
    %37 = vrot.lane.b32.xlu0 %v36, 80
    %v38 = vpop.permute.xlu0 %37
    %vm39 = vcmask 720512
    %40 = vst.msk [vmem:[#allocation0] sm:$0x1] %vm39, %v38
    %s41 = scalar_lea.vmem %s0, 9
    %v42 = vld [vmem:[%s41] sm:$0x1]
    %43 = vrot.lane.b32.xlu0 %v42, 72
    %v44 = vpop.permute.xlu0 %43
    %vm45 = vcmask 654912
    %46 = vst.msk [vmem:[#allocation0] sm:$0x1] %vm45, %v44
    %s47 = scalar_lea.vmem %s0, 8
    %v48 = vld [vmem:[%s47] sm:$0x1]
    %49 = vrot.lane.b32.xlu0 %v48, 64
    %v50 = vpop.permute.xlu0 %49
    %vm51 = vcmask 589312
    %52 = vst.msk [vmem:[#allocation0] sm:$0x1] %vm51, %v50
    %s53 = scalar_lea.vmem %s0, 7
    %v54 = vld [vmem:[%s53] sm:$0x1]
    %55 = vrot.lane.b32.xlu0 %v54, 56
    %v56 = vpop.permute.xlu0 %55
    %vm57 = vcmask 523712
    %58 = vst.msk [vmem:[#allocation0] sm:$0x1] %vm57, %v56
    %s59 = scalar_lea.vmem %s0, 6
    %v60 = vld [vmem:[%s59] sm:$0x1]
    %61 = vrot.lane.b32.xlu0 %v60, 48
    %v62 = vpop.permute.xlu0 %61
    %vm63 = vcmask 458112
    %64 = vst.msk [vmem:[#allocation0] sm:$0x1] %vm63, %v62
    %s65 = scalar_lea.vmem %s0, 5
    %v66 = vld [vmem:[%s65] sm:$0x1]
    %67 = vrot.lane.b32.xlu0 %v66, 40
    %v68 = vpop.permute.xlu0 %67
    %vm69 = vcmask 392512
    %70 = vst.msk [vmem:[#allocation0] sm:$0x1] %vm69, %v68
    %s71 = scalar_lea.vmem %s0, 4
    %v72 = vld [vmem:[%s71] sm:$0x1]
    %73 = vrot.lane.b32.xlu0 %v72, 32
    %v74 = vpop.permute.xlu0 %73
    %vm75 = vcmask 326912
    %76 = vst.msk [vmem:[#allocation0] sm:$0x1] %vm75, %v74
    %s77 = scalar_lea.vmem %s0, 3
    %v78 = vld [vmem:[%s77] sm:$0x1]
    %79 = vrot.lane.b32.xlu0 %v78, 24
    %v80 = vpop.permute.xlu0 %79
    %vm81 = vcmask 261312
    %82 = vst.msk [vmem:[#allocation0] sm:$0x1] %vm81, %v80
    %s83 = scalar_lea.vmem %s0, 2
    %v84 = vld [vmem:[%s83] sm:$0x1]
    %85 = vrot.lane.b32.xlu0 %v84, 16
    %v86 = vpop.permute.xlu0 %85
    %vm87 = vcmask 195712
    %88 = vst.msk [vmem:[#allocation0] sm:$0x1] %vm87, %v86
    %s89 = scalar_lea.vmem %s0, 1
    %v90 = vld [vmem:[%s89] sm:$0x1]
    %91 = vrot.lane.b32.xlu0 %v90, 8
    %v92 = vpop.permute.xlu0 %91
    %vm93 = vcmask 130112
    %94 = vst.msk [vmem:[#allocation0] sm:$0x1] %vm93, %v92
    %s96 = sshllo.u32 0, 1
    %v98 = vld [vmem:[#allocation0] sm:%s96]
    %s99 = sshllo.u32 0, 1
    %100 = vst [vmem:[%s1] sm:%s99] %v98

// kernel: resblock_pallas.1
$region0: #{resblock_pallas.1}
  #allocation0 [shape = 'u32[]', space=smem, size = 0x4, offset = 0x4, fixed_abs, tag = 'smem constant byte address 0x4 - core index']
  #allocation1 [shape = 'u32[144,128]{1,0:T(1,128)}', space=vmem, size = 0x12000, scoped, tag = 'internal scratch']
  %s0 = inlined_call_operand.vmem [shape: f32[2,16,64], index: 0, kind: input, shape index: {}]
  %s1 = inlined_call_operand.vmem [shape: bf16[2,16,16], index: 1, kind: input, shape index: {}]
  %s2 = inlined_call_operand.vmem [shape: bf16[3,64,128], index: 2, kind: input, shape index: {}]
  %s3 = inlined_call_operand.vmem [shape: bf16[3,128,128], index: 3, kind: input, shape index: {}]
  %s4 = inlined_call_operand.vmem [shape: bf16[64,128], index: 4, kind: input, shape index: {}]
  %s5 = inlined_call_operand.vmem [shape: f32[2,128], index: 5, kind: input, shape index: {}]
  %s6 = inlined_call_operand.vmem [shape: f32[2,16,128], index: 6, kind: output, shape index: {}]
  %s7 = sld [smem:[#allocation0]]
  $region57: #{resblock_pallas.1} parent=0
    _
  %s9 = ssub.s32 1, %s7
  %s10 = scalar_select 0, %s9, %s7
  loop: start=0, step=1, limit=4
  $region2: #{resblock_pallas.1} parent=0 // loop_pre_header
    _
  $region3: #{resblock_pallas.1} parent=0 // loop_header
    %s12 = sphi 0, %s16
    %p13 = scmp.ge.s32.totalorder %s12, 4
    %s22 = sphi 0, %s24
    %s25 = sphi 0, %s22
    %s26 = sphi 0, %s25
    %s42 = sphi 0, %s26
    %s46 = sphi 0, %s46
    %s48 = sphi 0, %s46
    %s49 = sphi 0, %s48
    %s63 = sphi 0, %s49
    %s67 = sphi 0, %s67
    %s69 = sphi 0, %s67
    %s70 = sphi 0, %s69
    %s84 = sphi 0, %s70
    %s88 = sphi 0, %s88
    %s90 = sphi 0, %s88
    %s91 = sphi 0, %s90
    %s105 = sphi 0, %s91
    %s109 = sphi 0, %s109
    %s111 = sphi 0, %s109
    %s112 = sphi 0, %s111
    %s126 = sphi 0, %s112
    %s130 = sphi 0, %s130
    %s132 = sphi 0, %s130
    %s133 = sphi 0, %s132
    %s147 = sphi 0, %s133
    %s153 = sphi 0, %s155
    %s156 = sphi 0, %s153
    %s157 = sphi 0, %s156
    %s173 = sphi 0, %s157
  $region4: #{resblock_pallas.1} parent=0 // loop_header_branch
    %15 = sbr.rel (%p13) target = $region8
  $region5: #{resblock_pallas.1} parent=0 // loop_body
    %s17 = ssub.s32 %s12, 1
    %s18 = ssub.s32 %s12, 2
    %s19 = sadd.s32 %s12, 1
    %s20 = ssub.s32 %s12, %s19
    %p21 = scmp.eq.s32.totalorder %s20, 0
    %s23 = sadd.s32 %s22, 1
    %s24 = scalar_select %p21, %s22, %s23
    %p27 = pneg %p21
    %p28 = scmp.eq.s32.totalorder %s12, 1
    %p29 = por %p27, %p28
    %p30 = scmp.ne.s32.totalorder %s22, %s25
    %p31 = scmp.eq.s32.totalorder %s12, 0
    %p32 = por %p30, %p31
    %p33 = scmp.ne.s32.totalorder %s22, %s25
    %p34 = scmp.eq.s32.totalorder %s17, 1
    %p35 = por %p33, %p34
    %p36 = scmp.ne.s32.totalorder %s25, %s26
    %p37 = scmp.eq.s32.totalorder %s17, 0
    %p38 = por %p36, %p37
    %p39 = scmp.ne.s32.totalorder %s25, %s26
    %p40 = scmp.eq.s32.totalorder %s18, 1
    %p41 = por %p39, %p40
    %p43 = scmp.ne.s32.totalorder %s26, %s42
    %p44 = scmp.eq.s32.totalorder %s18, 0
    %p45 = por %p43, %p44
    %s47 = sadd.s32 %s46, 1
    %p50 = scmp.eq.s32.totalorder %s12, 1
    %p51 = scmp.ne.s32.totalorder %s46, %s48
    %p52 = scmp.eq.s32.totalorder %s12, 0
    %p53 = por %p51, %p52
    %p54 = scmp.ne.s32.totalorder %s46, %s48
    %p55 = scmp.eq.s32.totalorder %s17, 1
    %p56 = por %p54, %p55
    %p57 = scmp.ne.s32.totalorder %s48, %s49
    %p58 = scmp.eq.s32.totalorder %s17, 0
    %p59 = por %p57, %p58
    %p60 = scmp.ne.s32.totalorder %s48, %s49
    %p61 = scmp.eq.s32.totalorder %s18, 1
    %p62 = por %p60, %p61
    %p64 = scmp.ne.s32.totalorder %s49, %s63
    %p65 = scmp.eq.s32.totalorder %s18, 0
    %p66 = por %p64, %p65
    %s68 = sadd.s32 %s67, 1
    %p71 = scmp.eq.s32.totalorder %s12, 1
    %p72 = scmp.ne.s32.totalorder %s67, %s69
    %p73 = scmp.eq.s32.totalorder %s12, 0
    %p74 = por %p72, %p73
    %p75 = scmp.ne.s32.totalorder %s67, %s69
    %p76 = scmp.eq.s32.totalorder %s17, 1
    %p77 = por %p75, %p76
    %p78 = scmp.ne.s32.totalorder %s69, %s70
    %p79 = scmp.eq.s32.totalorder %s17, 0
    %p80 = por %p78, %p79
    %p81 = scmp.ne.s32.totalorder %s69, %s70
    %p82 = scmp.eq.s32.totalorder %s18, 1
    %p83 = por %p81, %p82
    %p85 = scmp.ne.s32.totalorder %s70, %s84
    %p86 = scmp.eq.s32.totalorder %s18, 0
    %p87 = por %p85, %p86
    %s89 = sadd.s32 %s88, 1
    %p92 = scmp.eq.s32.totalorder %s12, 1
    %p93 = scmp.ne.s32.totalorder %s88, %s90
    %p94 = scmp.eq.s32.totalorder %s12, 0
    %p95 = por %p93, %p94
    %p96 = scmp.ne.s32.totalorder %s88, %s90
    %p97 = scmp.eq.s32.totalorder %s17, 1
    %p98 = por %p96, %p97
    %p99 = scmp.ne.s32.totalorder %s90, %s91
    %p100 = scmp.eq.s32.totalorder %s17, 0
    %p101 = por %p99, %p100
    %p102 = scmp.ne.s32.totalorder %s90, %s91
    %p103 = scmp.eq.s32.totalorder %s18, 1
    %p104 = por %p102, %p103
    %p106 = scmp.ne.s32.totalorder %s91, %s105
    %p107 = scmp.eq.s32.totalorder %s18, 0
    %p108 = por %p106, %p107
    %s110 = sadd.s32 %s109, 1
    %p113 = scmp.eq.s32.totalorder %s12, 1
    %p114 = scmp.ne.s32.totalorder %s109, %s111
    %p115 = scmp.eq.s32.totalorder %s12, 0
    %p116 = por %p114, %p115
    %p117 = scmp.ne.s32.totalorder %s109, %s111
    %p118 = scmp.eq.s32.totalorder %s17, 1
    %p119 = por %p117, %p118
    %p120 = scmp.ne.s32.totalorder %s111, %s112
    %p121 = scmp.eq.s32.totalorder %s17, 0
    %p122 = por %p120, %p121
    %p123 = scmp.ne.s32.totalorder %s111, %s112
    %p124 = scmp.eq.s32.totalorder %s18, 1
    %p125 = por %p123, %p124
    %p127 = scmp.ne.s32.totalorder %s112, %s126
    %p128 = scmp.eq.s32.totalorder %s18, 0
    %p129 = por %p127, %p128
    %s131 = sadd.s32 %s130, 1
    %p134 = scmp.eq.s32.totalorder %s12, 1
    %p135 = scmp.ne.s32.totalorder %s130, %s132
    %p136 = scmp.eq.s32.totalorder %s12, 0
    %p137 = por %p135, %p136
    %p138 = scmp.ne.s32.totalorder %s130, %s132
    %p139 = scmp.eq.s32.totalorder %s17, 1
    %p140 = por %p138, %p139
    %p141 = scmp.ne.s32.totalorder %s132, %s133
    %p142 = scmp.eq.s32.totalorder %s17, 0
    %p143 = por %p141, %p142
    %p144 = scmp.ne.s32.totalorder %s132, %s133
    %p145 = scmp.eq.s32.totalorder %s18, 1
    %p146 = por %p144, %p145
    %p148 = scmp.ne.s32.totalorder %s133, %s147
    %p149 = scmp.eq.s32.totalorder %s18, 0
    %p150 = por %p148, %p149
    %s151 = ssub.s32 %s12, %s19
    %p152 = scmp.eq.s32.totalorder %s151, 0
    %s154 = sadd.s32 %s153, 1
    %s155 = scalar_select %p152, %s153, %s154
    %p158 = pneg %p152
    %p159 = scmp.eq.s32.totalorder %s12, 1
    %p160 = por %p158, %p159
    %p161 = scmp.ne.s32.totalorder %s153, %s156
    %p162 = scmp.eq.s32.totalorder %s12, 0
    %p163 = por %p161, %p162
    %p164 = scmp.ne.s32.totalorder %s153, %s156
    %p165 = scmp.eq.s32.totalorder %s17, 1
    %p166 = por %p164, %p165
    %p167 = scmp.ne.s32.totalorder %s156, %s157
    %p168 = scmp.eq.s32.totalorder %s17, 0
    %p169 = por %p167, %p168
    %p170 = scmp.ne.s32.totalorder %s156, %s157
    %p171 = scmp.eq.s32.totalorder %s18, 1
    %p172 = por %p170, %p171
    %p174 = scmp.ne.s32.totalorder %s157, %s173
    %p175 = scmp.eq.s32.totalorder %s18, 0
    %p176 = por %p174, %p175
    %p177 = scmp.le.s32.totalorder 1, %s12
    %p178 = scmp.lt.s32.totalorder %s12, 3
    %p179 = pnand %p177, %p178
    %p180 = pneg %p179
    // Predicated region
    $region9: #{resblock_pallas.1} parent=5 // pred_check
      _
    $region10: #{resblock_pallas.1} parent=5 // pred_check_branch
      %182 = sbr.rel (%p179) target = $region12
    $region11: #{resblock_pallas.1} parent=5 // pred_region
      %s183 = ssub.s32 %s12, 1
      // Predicated region
      $region13: #{resblock_pallas.1} parent=11 // pred_check
        %p184 = pneg %p59
      $region14: #{resblock_pallas.1} parent=11 // pred_check_branch
        %186 = sbr.rel (%p184) target = $region16
      $region15: #{resblock_pallas.1} parent=11 // pred_region
        _
      $region16: #{resblock_pallas.1} parent=11 // pred_fallthru
        _
      // Predicated region
      $region17: #{resblock_pallas.1} parent=11 // pred_check
        %p187 = pneg %p80
      $region18: #{resblock_pallas.1} parent=11 // pred_check_branch
        %189 = sbr.rel (%p187) target = $region20
      $region19: #{resblock_pallas.1} parent=11 // pred_region
        _
      $region20: #{resblock_pallas.1} parent=11 // pred_fallthru
        _
      // Predicated region
      $region21: #{resblock_pallas.1} parent=11 // pred_check
        %p190 = pneg %p101
      $region22: #{resblock_pallas.1} parent=11 // pred_check_branch
        %192 = sbr.rel (%p190) target = $region24
      $region23: #{resblock_pallas.1} parent=11 // pred_region
        _
      $region24: #{resblock_pallas.1} parent=11 // pred_fallthru
        _
      // Predicated region
      $region25: #{resblock_pallas.1} parent=11 // pred_check
        %p193 = pneg %p122
      $region26: #{resblock_pallas.1} parent=11 // pred_check_branch
        %195 = sbr.rel (%p193) target = $region28
      $region27: #{resblock_pallas.1} parent=11 // pred_region
        _
      $region28: #{resblock_pallas.1} parent=11 // pred_fallthru
        _
      // Predicated region
      $region29: #{resblock_pallas.1} parent=11 // pred_check
        %p196 = pneg %p143
      $region30: #{resblock_pallas.1} parent=11 // pred_check_branch
        %198 = sbr.rel (%p196) target = $region32
      $region31: #{resblock_pallas.1} parent=11 // pred_region
        _
      $region32: #{resblock_pallas.1} parent=11 // pred_fallthru
        _
    $region12: #{resblock_pallas.1} parent=5 // pred_fallthru
      _
    %p199 = scmp.lt.s32.totalorder %s12, 2
    // Predicated region
    $region33: #{resblock_pallas.1} parent=5 // pred_check
      %p200 = pneg %p199
    $region34: #{resblock_pallas.1} parent=5 // pred_check_branch
      %202 = sbr.rel (%p200) target = $region36
    $region35: #{resblock_pallas.1} parent=5 // pred_region
      // Predicated region
      $region37: #{resblock_pallas.1} parent=35 // pred_check
        %p203 = pneg %p32
      $region38: #{resblock_pallas.1} parent=35 // pred_check_branch
        %205 = sbr.rel (%p203) target = $region40
      $region39: #{resblock_pallas.1} parent=35 // pred_region
        %p206 = scmp.lt.s32.totalorder %s12, 1
        %s207 = scalar_select %p206, %s12, 1
        %s208 = smul.addr %s207, 2
        %s209 = smul.addr %s208, 8
        %s210 = scalar_lea.vmem %s0, %s209
      $region40: #{resblock_pallas.1} parent=35 // pred_fallthru
        _
    $region36: #{resblock_pallas.1} parent=5 // pred_fallthru
      _
    %p211 = scmp.le.s32.totalorder 1, %s12
    %p212 = scmp.lt.s32.totalorder %s12, 3
    %p213 = pnand %p211, %p212
    %p214 = pneg %p213
    // Predicated region
    $region41: #{resblock_pallas.1} parent=5 // pred_check
      _
    $region42: #{resblock_pallas.1} parent=5 // pred_check_branch
      %216 = sbr.rel (%p213) target = $region44
    $region43: #{resblock_pallas.1} parent=5 // pred_region
      %s217 = ssub.s32 %s12, 1
      %p218 = scmp.lt.s32.totalorder %s17, 1
      %s219 = scalar_select %p218, %s17, 1
      %s220 = smul.addr %s219, 2
      %s221 = smul.addr %s220, 8
      %s222 = scalar_lea.vmem %s0, %s221
      %p223 = pneg %p38
      %p224 = pneg %p35
      %p225 = pneg %p59
      %p226 = pneg %p56
      %p227 = pneg %p80
      %p228 = pneg %p77
      %p229 = pneg %p101
      %p230 = pneg %p98
      %p231 = pneg %p122
      %p232 = pneg %p119
      %p233 = pneg %p143
      %p234 = pneg %p140
      %p235 = pneg %p169
      %p236 = pneg %p166
      %p237 = scmp.lt.s32.totalorder %s17, 1
      %s238 = scalar_select %p237, %s17, 1
      %s239 = smul.addr %s238, 2
      %s240 = smul.addr %s239, 8
      %s241 = scalar_lea.vmem %s6, %s240
      %p242 = scmp.lt.s32.totalorder %s17, 1
      %s243 = scalar_select %p242, %s17, 1
      %s244 = smul.addr %s243, 2
      %s245 = smul.addr %s244, 8
      %s246 = scalar_lea.vmem %s0, %s245
      %p247 = scmp.lt.s32.totalorder %s17, 1
      %s248 = scalar_select %p247, %s17, 1
      %s249 = smul.addr %s248, 2
      %s250 = smul.addr %s249, 8
      %s251 = scalar_lea.vmem %s6, %s250
      %v253 = vld [vmem:[%s246] sm:$0xff]
      %v254 = vld [vmem:[%s246 + $0x8] sm:$0xff]
      %v255 = vpack.c.bf16 %v254, %v253
      %v256 = vld [vmem:[%s5] sm:$0x3]
      %v257 = vld [vmem:[%s1] sm:$0xf]
      %v258 = vld [vmem:[%s1 + $0x4] sm:$0xf]
      %v261 = vunpack.c.l.b16 %v257
      %v262 = vunpack.c.l.b16 %v258
      %v263 = vpack.c.b16 %v262, %v261
      %vm264 = vcmask 130048
      %v266 = vsel %vm264, %v263, 0
      %268 = vmatprep.subr.bf16.mxu0 0
      %269 = vmatpush1.bf16.msra.mxu0 %v255
      %270 = vmatprep.subr.bf16.mxu0 0
      %271 = vmatpush1.bf16.msra.mxu0 0
      %272 = vmatprep.subr.bf16.mxu0 0
      %273 = vmatpush1.bf16.msra.mxu0 0
      %274 = vmatprep.subr.bf16.mxu0 0
      %275 = vmatpush1.bf16.msra.mxu0 0
      %276 = vmatprep.subr.bf16.mxu0 0
      %277 = vmatpush1.bf16.msra.mxu0 0
      %278 = vmatprep.subr.bf16.mxu0 0
      %279 = vmatpush1.bf16.msra.mxu0 0
      %280 = vmatprep.subr.bf16.mxu0 0
      %281 = vmatpush1.bf16.msra.mxu0 0
      %282 = vmatprep.subr.bf16.mxu0 0
      %283 = vmatpush1.bf16.msra.mxu0 0
      %284 = vmatprep.subr.bf16.mxu0 0
      %285 = vmatpush1.bf16.msra.mxu0 0
      %286 = vmatprep.subr.bf16.mxu0 0
      %287 = vmatpush1.bf16.msra.mxu0 0
      %288 = vmatprep.subr.bf16.mxu0 0
      %289 = vmatpush1.bf16.msra.mxu0 0
      %290 = vmatprep.subr.bf16.mxu0 0
      %291 = vmatpush1.bf16.msra.mxu0 0
      %292 = vmatprep.subr.bf16.mxu0 0
      %293 = vmatpush1.bf16.msra.mxu0 0
      %294 = vmatprep.subr.bf16.mxu0 0
      %295 = vmatpush1.bf16.msra.mxu0 0
      %296 = vmatprep.subr.bf16.mxu0 0
      %297 = vmatpush1.bf16.msra.mxu0 0
      %298 = vmatprep.subr.bf16.mxu0 0
      %299 = vmatpush1.bf16.msra.mxu0 0
      %300 = vmatprep.mubr.bf16.mxu0 0
      %301 = vmatmul.mubr.bf16.gmra.mrb[0].mxu0 %v266
      %v302 = vpop.f32.mrb[0].mxu0
      %v303 = vadd.f32 0.0, %v302
      %v304 = vpop.f32.mrb[0].mxu0
      %v305 = vpop.f32.mrb[0].mxu0
      %v306 = vadd.f32 0.0, %v305
      %v307 = vpop.f32.mrb[0].mxu0
      %308 = vdwg.mxu0
      %v309 = vpack.c.bf16 %v306, %v303
      %s310 = scalar_lea.vmem %s1, 8
      %v311 = vld [vmem:[%s310] sm:$0xf]
      %v312 = vld [vmem:[%s310 + $0x4] sm:$0xf]
      %v315 = vunpack.c.l.b16 %v311
      %v316 = vunpack.c.l.b16 %v312
      %v317 = vpack.c.b16 %v316, %v315
      %v319 = vsel %vm264, %v317, 0
      %321 = vmatprep.subr.bf16.mxu0 0
      %322 = vmatpush1.bf16.msra.mxu0 %v255
      %323 = vmatprep.subr.bf16.mxu0 0
      %324 = vmatpush1.bf16.msra.mxu0 0
      %325 = vmatprep.subr.bf16.mxu0 0
      %326 = vmatpush1.bf16.msra.mxu0 0
      %327 = vmatprep.subr.bf16.mxu0 0
      %328 = vmatpush1.bf16.msra.mxu0 0
      %329 = vmatprep.subr.bf16.mxu0 0
      %330 = vmatpush1.bf16.msra.mxu0 0
      %331 = vmatprep.subr.bf16.mxu0 0
      %332 = vmatpush1.bf16.msra.mxu0 0
      %333 = vmatprep.subr.bf16.mxu0 0
      %334 = vmatpush1.bf16.msra.mxu0 0
      %335 = vmatprep.subr.bf16.mxu0 0
      %336 = vmatpush1.bf16.msra.mxu0 0
      %337 = vmatprep.subr.bf16.mxu0 0
      %338 = vmatpush1.bf16.msra.mxu0 0
      %339 = vmatprep.subr.bf16.mxu0 0
      %340 = vmatpush1.bf16.msra.mxu0 0
      %341 = vmatprep.subr.bf16.mxu0 0
      %342 = vmatpush1.bf16.msra.mxu0 0
      %343 = vmatprep.subr.bf16.mxu0 0
      %344 = vmatpush1.bf16.msra.mxu0 0
      %345 = vmatprep.subr.bf16.mxu0 0
      %346 = vmatpush1.bf16.msra.mxu0 0
      %347 = vmatprep.subr.bf16.mxu0 0
      %348 = vmatpush1.bf16.msra.mxu0 0
      %349 = vmatprep.subr.bf16.mxu0 0
      %350 = vmatpush1.bf16.msra.mxu0 0
      %351 = vmatprep.subr.bf16.mxu0 0
      %352 = vmatpush1.bf16.msra.mxu0 0
      %353 = vmatprep.mubr.bf16.mxu0 0
      %354 = vmatmul.mubr.bf16.gmra.mrb[0].mxu0 %v319
      %v355 = vpop.f32.mrb[0].mxu0
      %v356 = vadd.f32 0.0, %v355
      %v357 = vpop.f32.mrb[0].mxu0
      %v358 = vpop.f32.mrb[0].mxu0
      %v359 = vadd.f32 0.0, %v358
      %v360 = vpop.f32.mrb[0].mxu0
      %361 = vdwg.mxu0
      %v362 = vpack.c.bf16 %v359, %v356
      %s363 = scalar_lea.vmem %s2, 32
      %v364 = vld [vmem:[%s363] sm:$0xf]
      %v365 = vld [vmem:[%s363 + $0x4] sm:$0xf]
      %v366 = vld [vmem:[%s363 + $0x8] sm:$0xf]
      %v367 = vld [vmem:[%s363 + $0xc] sm:$0xf]
      %v368 = vld [vmem:[%s363 + $0x10] sm:$0xf]
      %v369 = vld [vmem:[%s363 + $0x14] sm:$0xf]
      %v370 = vld [vmem:[%s363 + $0x18] sm:$0xf]
      %v371 = vld [vmem:[%s363 + $0x1c] sm:$0xf]
      %v372 = vld [vmem:[%s2] sm:$0xf]
      %v373 = vld [vmem:[%s2 + $0x4] sm:$0xf]
      %v374 = vld [vmem:[%s2 + $0x8] sm:$0xf]
      %v375 = vld [vmem:[%s2 + $0xc] sm:$0xf]
      %v376 = vld [vmem:[%s2 + $0x10] sm:$0xf]
      %v377 = vld [vmem:[%s2 + $0x14] sm:$0xf]
      %v378 = vld [vmem:[%s2 + $0x18] sm:$0xf]
      %v379 = vld [vmem:[%s2 + $0x1c] sm:$0xf]
      %v388 = vunpack.c.l.b16 %v372
      %v389 = vunpack.c.l.b16 %v373
      %v390 = vunpack.c.l.b16 %v374
      %v391 = vunpack.c.l.b16 %v375
      %v392 = vunpack.c.l.b16 %v376
      %v393 = vunpack.c.l.b16 %v377
      %v394 = vunpack.c.l.b16 %v378
      %v395 = vunpack.c.l.b16 %v379
      %v396 = vpack.c.b16 %v389, %v388
      %v397 = vpack.c.b16 %v391, %v390
      %v398 = vpack.c.b16 %v393, %v392
      %v399 = vpack.c.b16 %v395, %v394
      %vm404 = vcmask 523264
      %v406 = vsel %vm404, %v309, 0
      %408 = vmatprep.subr.bf16.mxu0 0
      %409 = vmatpush1.bf16.msra.mxu0 %v396
      %410 = vmatprep.subr.bf16.mxu0 0
      %411 = vmatpush1.bf16.msra.mxu0 %v397
      %412 = vmatprep.subr.bf16.mxu0 0
      %413 = vmatpush1.bf16.msra.mxu0 %v398
      %414 = vmatprep.subr.bf16.mxu0 0
      %415 = vmatpush1.bf16.msra.mxu0 %v399
      %416 = vmatprep.subr.bf16.mxu0 0
      %417 = vmatpush1.bf16.msra.mxu0 0
      %418 = vmatprep.subr.bf16.mxu0 0
      %419 = vmatpush1.bf16.msra.mxu0 0
      %420 = vmatprep.subr.bf16.mxu0 0
      %421 = vmatpush1.bf16.msra.mxu0 0
      %422 = vmatprep.subr.bf16.mxu0 0
      %423 = vmatpush1.bf16.msra.mxu0 0
      %424 = vmatprep.subr.bf16.mxu0 0
      %425 = vmatpush1.bf16.msra.mxu0 0
      %426 = vmatprep.subr.bf16.mxu0 0
      %427 = vmatpush1.bf16.msra.mxu0 0
      %428 = vmatprep.subr.bf16.mxu0 0
      %429 = vmatpush1.bf16.msra.mxu0 0
      %430 = vmatprep.subr.bf16.mxu0 0
      %431 = vmatpush1.bf16.msra.mxu0 0
      %432 = vmatprep.subr.bf16.mxu0 0
      %433 = vmatpush1.bf16.msra.mxu0 0
      %434 = vmatprep.subr.bf16.mxu0 0
      %435 = vmatpush1.bf16.msra.mxu0 0
      %436 = vmatprep.subr.bf16.mxu0 0
      %437 = vmatpush1.bf16.msra.mxu0 0
      %438 = vmatprep.subr.bf16.mxu0 0
      %439 = vmatpush1.bf16.msra.mxu0 0
      %440 = vmatprep.mubr.bf16.mxu0 0
      %441 = vmatmul.mubr.bf16.gmra.mrb[0].mxu0 %v406
      %v442 = vpop.f32.mrb[0].mxu0
      %v443 = vadd.f32 0.0, %v442
      %v444 = vpop.f32.mrb[0].mxu0
      %v445 = vpop.f32.mrb[0].mxu0
      %v446 = vadd.f32 0.0, %v445
      %v447 = vpop.f32.mrb[0].mxu0
      %448 = vdwg.mxu0
      %v457 = vunpack.c.l.b16 %v364
      %v458 = vunpack.c.l.b16 %v365
      %v459 = vunpack.c.l.b16 %v366
      %v460 = vunpack.c.l.b16 %v367
      %v461 = vunpack.c.l.b16 %v368
      %v462 = vunpack.c.l.b16 %v369
      %v463 = vunpack.c.l.b16 %v370
      %v464 = vunpack.c.l.b16 %v371
      %v465 = vpack.c.b16 %v458, %v457
      %v466 = vpack.c.b16 %v460, %v459
      %v467 = vpack.c.b16 %v462, %v461
      %v468 = vpack.c.b16 %v464, %v463
      %v474 = vsel %vm404, %v255, 0
      %476 = vmatprep.subr.bf16.mxu0 0
      %477 = vmatpush1.bf16.msra.mxu0 %v465
      %478 = vmatprep.subr.bf16.mxu0 0
      %479 = vmatpush1.bf16.msra.mxu0 %v466
      %480 = vmatprep.subr.bf16.mxu0 0
      %481 = vmatpush1.bf16.msra.mxu0 %v467
      %482 = vmatprep.subr.bf16.mxu0 0
      %483 = vmatpush1.bf16.msra.mxu0 %v468
      %484 = vmatprep.subr.bf16.mxu0 0
      %485 = vmatpush1.bf16.msra.mxu0 0
      %486 = vmatprep.subr.bf16.mxu0 0
      %487 = vmatpush1.bf16.msra.mxu0 0
      %488 = vmatprep.subr.bf16.mxu0 0
      %489 = vmatpush1.bf16.msra.mxu0 0
      %490 = vmatprep.subr.bf16.mxu0 0
      %491 = vmatpush1.bf16.msra.mxu0 0
      %492 = vmatprep.subr.bf16.mxu0 0
      %493 = vmatpush1.bf16.msra.mxu0 0
      %494 = vmatprep.subr.bf16.mxu0 0
      %495 = vmatpush1.bf16.msra.mxu0 0
      %496 = vmatprep.subr.bf16.mxu0 0
      %497 = vmatpush1.bf16.msra.mxu0 0
      %498 = vmatprep.subr.bf16.mxu0 0
      %499 = vmatpush1.bf16.msra.mxu0 0
      %500 = vmatprep.subr.bf16.mxu0 0
      %501 = vmatpush1.bf16.msra.mxu0 0
      %502 = vmatprep.subr.bf16.mxu0 0
      %503 = vmatpush1.bf16.msra.mxu0 0
      %504 = vmatprep.subr.bf16.mxu0 0
      %505 = vmatpush1.bf16.msra.mxu0 0
      %506 = vmatprep.subr.bf16.mxu0 0
      %507 = vmatpush1.bf16.msra.mxu0 0
      %508 = vmatprep.mubr.bf16.mxu0 0
      %509 = vmatmul.mubr.bf16.gmra.mrb[0].mxu0 %v474
      %v510 = vpop.f32.mrb[0].mxu0
      %v511 = vadd.f32 %v443, %v510
      %v512 = vpop.f32.mrb[0].mxu0
      %v513 = vpop.f32.mrb[0].mxu0
      %v514 = vadd.f32 %v446, %v513
      %v515 = vpop.f32.mrb[0].mxu0
      %516 = vdwg.mxu0
      %s517 = scalar_lea.vmem %s2, 64
      %v518 = vld [vmem:[%s517] sm:$0xf]
      %v519 = vld [vmem:[%s517 + $0x4] sm:$0xf]
      %v520 = vld [vmem:[%s517 + $0x8] sm:$0xf]
      %v521 = vld [vmem:[%s517 + $0xc] sm:$0xf]
      %v522 = vld [vmem:[%s517 + $0x10] sm:$0xf]
      %v523 = vld [vmem:[%s517 + $0x14] sm:$0xf]
      %v524 = vld [vmem:[%s517 + $0x18] sm:$0xf]
      %v525 = vld [vmem:[%s517 + $0x1c] sm:$0xf]
      %v534 = vunpack.c.l.b16 %v518
      %v535 = vunpack.c.l.b16 %v519
      %v536 = vunpack.c.l.b16 %v520
      %v537 = vunpack.c.l.b16 %v521
      %v538 = vunpack.c.l.b16 %v522
      %v539 = vunpack.c.l.b16 %v523
      %v540 = vunpack.c.l.b16 %v524
      %v541 = vunpack.c.l.b16 %v525
      %v542 = vpack.c.b16 %v535, %v534
      %v543 = vpack.c.b16 %v537, %v536
      %v544 = vpack.c.b16 %v539, %v538
      %v545 = vpack.c.b16 %v541, %v540
      %v551 = vsel %vm404, %v362, 0
      %553 = vmatprep.subr.bf16.mxu0 0
      %554 = vmatpush1.bf16.msra.mxu0 %v542
      %555 = vmatprep.subr.bf16.mxu0 0
      %556 = vmatpush1.bf16.msra.mxu0 %v543
      %557 = vmatprep.subr.bf16.mxu0 0
      %558 = vmatpush1.bf16.msra.mxu0 %v544
      %559 = vmatprep.subr.bf16.mxu0 0
      %560 = vmatpush1.bf16.msra.mxu0 %v545
      %561 = vmatprep.subr.bf16.mxu0 0
      %562 = vmatpush1.bf16.msra.mxu0 0
      %563 = vmatprep.subr.bf16.mxu0 0
      %564 = vmatpush1.bf16.msra.mxu0 0
      %565 = vmatprep.subr.bf16.mxu0 0
      %566 = vmatpush1.bf16.msra.mxu0 0
      %567 = vmatprep.subr.bf16.mxu0 0
      %568 = vmatpush1.bf16.msra.mxu0 0
      %569 = vmatprep.subr.bf16.mxu0 0
      %570 = vmatpush1.bf16.msra.mxu0 0
      %571 = vmatprep.subr.bf16.mxu0 0
      %572 = vmatpush1.bf16.msra.mxu0 0
      %573 = vmatprep.subr.bf16.mxu0 0
      %574 = vmatpush1.bf16.msra.mxu0 0
      %575 = vmatprep.subr.bf16.mxu0 0
      %576 = vmatpush1.bf16.msra.mxu0 0
      %577 = vmatprep.subr.bf16.mxu0 0
      %578 = vmatpush1.bf16.msra.mxu0 0
      %579 = vmatprep.subr.bf16.mxu0 0
      %580 = vmatpush1.bf16.msra.mxu0 0
      %581 = vmatprep.subr.bf16.mxu0 0
      %582 = vmatpush1.bf16.msra.mxu0 0
      %583 = vmatprep.subr.bf16.mxu0 0
      %584 = vmatpush1.bf16.msra.mxu0 0
      %585 = vmatprep.mubr.bf16.mxu0 0
      %586 = vmatmul.mubr.bf16.gmra.mrb[0].mxu0 %v551
      %v587 = vpop.f32.mrb[0].mxu0
      %v588 = vadd.f32 0.0, %v587
      %v589 = vpop.f32.mrb[0].mxu0
      %v590 = vpop.f32.mrb[0].mxu0
      %v591 = vadd.f32 0.0, %v590
      %v592 = vpop.f32.mrb[0].mxu0
      %593 = vdwg.mxu0
      %v594 = vadd.f32 %v511, %v588
      %v595 = vadd.f32 %v514, %v591
      %v596 = vlaneseq
      %v597 = vshrl.u32 %v596, 7
      %v598 = vsub.s32 0, %v597
      %v599 = vrot.slane %v256, %v598
      %v600 = vadd.f32 %v594, %v599
      %v601 = vadd.f32 %v595, %v599
      %v602 = vmax.f32 %v600, 0.0
      %v603 = vmax.f32 %v601, 0.0
      %v604 = vpack.c.bf16 %v603, %v602
      %605 = vmatprep.subr.bf16.mxu0 0
      %606 = vmatpush1.bf16.msra.mxu0 %v604
      %607 = vmatprep.subr.bf16.mxu0 0
      %608 = vmatpush1.bf16.msra.mxu0 0
      %609 = vmatprep.subr.bf16.mxu0 0
      %610 = vmatpush1.bf16.msra.mxu0 0
      %611 = vmatprep.subr.bf16.mxu0 0
      %612 = vmatpush1.bf16.msra.mxu0 0
      %613 = vmatprep.subr.bf16.mxu0 0
      %614 = vmatpush1.bf16.msra.mxu0 0
      %615 = vmatprep.subr.bf16.mxu0 0
      %616 = vmatpush1.bf16.msra.mxu0 0
      %617 = vmatprep.subr.bf16.mxu0 0
      %618 = vmatpush1.bf16.msra.mxu0 0
      %619 = vmatprep.subr.bf16.mxu0 0
      %620 = vmatpush1.bf16.msra.mxu0 0
      %621 = vmatprep.subr.bf16.mxu0 0
      %622 = vmatpush1.bf16.msra.mxu0 0
      %623 = vmatprep.subr.bf16.mxu0 0
      %624 = vmatpush1.bf16.msra.mxu0 0
      %625 = vmatprep.subr.bf16.mxu0 0
      %626 = vmatpush1.bf16.msra.mxu0 0
      %627 = vmatprep.subr.bf16.mxu0 0
      %628 = vmatpush1.bf16.msra.mxu0 0
      %629 = vmatprep.subr.bf16.mxu0 0
      %630 = vmatpush1.bf16.msra.mxu0 0
      %631 = vmatprep.subr.bf16.mxu0 0
      %632 = vmatpush1.bf16.msra.mxu0 0
      %633 = vmatprep.subr.bf16.mxu0 0
      %634 = vmatpush1.bf16.msra.mxu0 0
      %635 = vmatprep.subr.bf16.mxu0 0
      %636 = vmatpush1.bf16.msra.mxu0 0
      %637 = vmatprep.mubr.bf16.mxu0 0
      %638 = vmatmul.mubr.bf16.gmra.mrb[0].mxu0 %v266
      %v639 = vpop.f32.mrb[0].mxu0
      %v640 = vadd.f32 0.0, %v639
      %v641 = vpop.f32.mrb[0].mxu0
      %v642 = vpop.f32.mrb[0].mxu0
      %v643 = vadd.f32 0.0, %v642
      %v644 = vpop.f32.mrb[0].mxu0
      %645 = vdwg.mxu0
      %v646 = vpack.c.bf16 %v643, %v640
      %647 = vmatprep.subr.bf16.mxu0 0
      %648 = vmatpush1.bf16.msra.mxu0 %v604
      %649 = vmatprep.subr.bf16.mxu0 0
      %650 = vmatpush1.bf16.msra.mxu0 0
      %651 = vmatprep.subr.bf16.mxu0 0
      %652 = vmatpush1.bf16.msra.mxu0 0
      %653 = vmatprep.subr.bf16.mxu0 0
      %654 = vmatpush1.bf16.msra.mxu0 0
      %655 = vmatprep.subr.bf16.mxu0 0
      %656 = vmatpush1.bf16.msra.mxu0 0
      %657 = vmatprep.subr.bf16.mxu0 0
      %658 = vmatpush1.bf16.msra.mxu0 0
      %659 = vmatprep.subr.bf16.mxu0 0
      %660 = vmatpush1.bf16.msra.mxu0 0
      %661 = vmatprep.subr.bf16.mxu0 0
      %662 = vmatpush1.bf16.msra.mxu0 0
      %663 = vmatprep.subr.bf16.mxu0 0
      %664 = vmatpush1.bf16.msra.mxu0 0
      %665 = vmatprep.subr.bf16.mxu0 0
      %666 = vmatpush1.bf16.msra.mxu0 0
      %667 = vmatprep.subr.bf16.mxu0 0
      %668 = vmatpush1.bf16.msra.mxu0 0
      %669 = vmatprep.subr.bf16.mxu0 0
      %670 = vmatpush1.bf16.msra.mxu0 0
      %671 = vmatprep.subr.bf16.mxu0 0
      %672 = vmatpush1.bf16.msra.mxu0 0
      %673 = vmatprep.subr.bf16.mxu0 0
      %674 = vmatpush1.bf16.msra.mxu0 0
      %675 = vmatprep.subr.bf16.mxu0 0
      %676 = vmatpush1.bf16.msra.mxu0 0
      %677 = vmatprep.subr.bf16.mxu0 0
      %678 = vmatpush1.bf16.msra.mxu0 0
      %679 = vmatprep.mubr.bf16.mxu0 0
      %680 = vmatmul.mubr.bf16.gmra.mrb[0].mxu0 %v319
      %v681 = vpop.f32.mrb[0].mxu0
      %v682 = vadd.f32 0.0, %v681
      %v683 = vpop.f32.mrb[0].mxu0
      %v684 = vpop.f32.mrb[0].mxu0
      %v685 = vadd.f32 0.0, %v684
      %v686 = vpop.f32.mrb[0].mxu0
      %687 = vdwg.mxu0
      %v688 = vpack.c.bf16 %v685, %v682
      %s689 = scalar_lea.vmem %s3, 64
      %v690 = vld [vmem:[%s689] sm:$0xf]
      %v691 = vld [vmem:[%s689 + $0x4] sm:$0xf]
      %v692 = vld [vmem:[%s689 + $0x8] sm:$0xf]
      %v693 = vld [vmem:[%s689 + $0xc] sm:$0xf]
      %v694 = vld [vmem:[%s689 + $0x10] sm:$0xf]
      %v695 = vld [vmem:[%s689 + $0x14] sm:$0xf]
      %v696 = vld [vmem:[%s689 + $0x18] sm:$0xf]
      %v697 = vld [vmem:[%s689 + $0x1c] sm:$0xf]
      %v698 = vld [vmem:[%s689 + $0x20] sm:$0xf]
      %v699 = vld [vmem:[%s689 + $0x24] sm:$0xf]
      %v700 = vld [vmem:[%s689 + $0x28] sm:$0xf]
      %v701 = vld [vmem:[%s689 + $0x2c] sm:$0xf]
      %v702 = vld [vmem:[%s689 + $0x30] sm:$0xf]
      %v703 = vld [vmem:[%s689 + $0x34] sm:$0xf]
      %v704 = vld [vmem:[%s689 + $0x38] sm:$0xf]
      %v705 = vld [vmem:[%s689 + $0x3c] sm:$0xf]
      %v706 = vld [vmem:[%s3] sm:$0xf]
      %v707 = vld [vmem:[%s3 + $0x4] sm:$0xf]
      %v708 = vld [vmem:[%s3 + $0x8] sm:$0xf]
      %v709 = vld [vmem:[%s3 + $0xc] sm:$0xf]
      %v710 = vld [vmem:[%s3 + $0x10] sm:$0xf]
      %v711 = vld [vmem:[%s3 + $0x14] sm:$0xf]
      %v712 = vld [vmem:[%s3 + $0x18] sm:$0xf]
      %v713 = vld [vmem:[%s3 + $0x1c] sm:$0xf]
      %v714 = vld [vmem:[%s3 + $0x20] sm:$0xf]
      %v715 = vld [vmem:[%s3 + $0x24] sm:$0xf]
      %v716 = vld [vmem:[%s3 + $0x28] sm:$0xf]
      %v717 = vld [vmem:[%s3 + $0x2c] sm:$0xf]
      %v718 = vld [vmem:[%s3 + $0x30] sm:$0xf]
      %v719 = vld [vmem:[%s3 + $0x34] sm:$0xf]
      %v720 = vld [vmem:[%s3 + $0x38] sm:$0xf]
      %v721 = vld [vmem:[%s3 + $0x3c] sm:$0xf]
      %v738 = vunpack.c.l.b16 %v706
      %v739 = vunpack.c.l.b16 %v707
      %v740 = vunpack.c.l.b16 %v708
      %v741 = vunpack.c.l.b16 %v709
      %v742 = vunpack.c.l.b16 %v710
      %v743 = vunpack.c.l.b16 %v711
      %v744 = vunpack.c.l.b16 %v712
      %v745 = vunpack.c.l.b16 %v713
      %v746 = vunpack.c.l.b16 %v714
      %v747 = vunpack.c.l.b16 %v715
      %v748 = vunpack.c.l.b16 %v716
      %v749 = vunpack.c.l.b16 %v717
      %v750 = vunpack.c.l.b16 %v718
      %v751 = vunpack.c.l.b16 %v719
      %v752 = vunpack.c.l.b16 %v720
      %v753 = vunpack.c.l.b16 %v721
      %v754 = vpack.c.b16 %v739, %v738
      %v755 = vpack.c.b16 %v741, %v740
      %v756 = vpack.c.b16 %v743, %v742
      %v757 = vpack.c.b16 %v745, %v744
      %v758 = vpack.c.b16 %v747, %v746
      %v759 = vpack.c.b16 %v749, %v748
      %v760 = vpack.c.b16 %v751, %v750
      %v761 = vpack.c.b16 %v753, %v752
      %770 = vmatprep.subr.bf16.mxu0 0
      %771 = vmatpush1.bf16.msra.mxu0 %v754
      %772 = vmatprep.subr.bf16.mxu0 0
      %773 = vmatpush1.bf16.msra.mxu0 %v755
      %774 = vmatprep.subr.bf16.mxu0 0
      %775 = vmatpush1.bf16.msra.mxu0 %v756
      %776 = vmatprep.subr.bf16.mxu0 0
      %777 = vmatpush1.bf16.msra.mxu0 %v757
      %778 = vmatprep.subr.bf16.mxu0 0
      %779 = vmatpush1.bf16.msra.mxu0 %v758
      %780 = vmatprep.subr.bf16.mxu0 0
      %781 = vmatpush1.bf16.msra.mxu0 %v759
      %782 = vmatprep.subr.bf16.mxu0 0
      %783 = vmatpush1.bf16.msra.mxu0 %v760
      %784 = vmatprep.subr.bf16.mxu0 0
      %785 = vmatpush1.bf16.msra.mxu0 %v761
      %786 = vmatprep.subr.bf16.mxu0 0
      %787 = vmatpush1.bf16.msra.mxu0 0
      %788 = vmatprep.subr.bf16.mxu0 0
      %789 = vmatpush1.bf16.msra.mxu0 0
      %790 = vmatprep.subr.bf16.mxu0 0
      %791 = vmatpush1.bf16.msra.mxu0 0
      %792 = vmatprep.subr.bf16.mxu0 0
      %793 = vmatpush1.bf16.msra.mxu0 0
      %794 = vmatprep.subr.bf16.mxu0 0
      %795 = vmatpush1.bf16.msra.mxu0 0
      %796 = vmatprep.subr.bf16.mxu0 0
      %797 = vmatpush1.bf16.msra.mxu0 0
      %798 = vmatprep.subr.bf16.mxu0 0
      %799 = vmatpush1.bf16.msra.mxu0 0
      %800 = vmatprep.subr.bf16.mxu0 0
      %801 = vmatpush1.bf16.msra.mxu0 0
      %802 = vmatprep.mubr.bf16.mxu0 0
      %803 = vmatmul.mubr.bf16.gmra.mrb[0].mxu0 %v646
      %v804 = vpop.f32.mrb[0].mxu0
      %v805 = vadd.f32 0.0, %v804
      %v806 = vpop.f32.mrb[0].mxu0
      %v807 = vpop.f32.mrb[0].mxu0
      %v808 = vadd.f32 0.0, %v807
      %v809 = vpop.f32.mrb[0].mxu0
      %810 = vdwg.mxu0
      %v827 = vunpack.c.l.b16 %v690
      %v828 = vunpack.c.l.b16 %v691
      %v829 = vunpack.c.l.b16 %v692
      %v830 = vunpack.c.l.b16 %v693
      %v831 = vunpack.c.l.b16 %v694
      %v832 = vunpack.c.l.b16 %v695
      %v833 = vunpack.c.l.b16 %v696
      %v834 = vunpack.c.l.b16 %v697
      %v835 = vunpack.c.l.b16 %v698
      %v836 = vunpack.c.l.b16 %v699
      %v837 = vunpack.c.l.b16 %v700
      %v838 = vunpack.c.l.b16 %v701
      %v839 = vunpack.c.l.b16 %v702
      %v840 = vunpack.c.l.b16 %v703
      %v841 = vunpack.c.l.b16 %v704
      %v842 = vunpack.c.l.b16 %v705
      %v843 = vpack.c.b16 %v828, %v827
      %v844 = vpack.c.b16 %v830, %v829
      %v845 = vpack.c.b16 %v832, %v831
      %v846 = vpack.c.b16 %v834, %v833
      %v847 = vpack.c.b16 %v836, %v835
      %v848 = vpack.c.b16 %v838, %v837
      %v849 = vpack.c.b16 %v840, %v839
      %v850 = vpack.c.b16 %v842, %v841
      %859 = vmatprep.subr.bf16.mxu0 0
      %860 = vmatpush1.bf16.msra.mxu0 %v843
      %861 = vmatprep.subr.bf16.mxu0 0
      %862 = vmatpush1.bf16.msra.mxu0 %v844
      %863 = vmatprep.subr.bf16.mxu0 0
      %864 = vmatpush1.bf16.msra.mxu0 %v845
      %865 = vmatprep.subr.bf16.mxu0 0
      %866 = vmatpush1.bf16.msra.mxu0 %v846
      %867 = vmatprep.subr.bf16.mxu0 0
      %868 = vmatpush1.bf16.msra.mxu0 %v847
      %869 = vmatprep.subr.bf16.mxu0 0
      %870 = vmatpush1.bf16.msra.mxu0 %v848
      %871 = vmatprep.subr.bf16.mxu0 0
      %872 = vmatpush1.bf16.msra.mxu0 %v849
      %873 = vmatprep.subr.bf16.mxu0 0
      %874 = vmatpush1.bf16.msra.mxu0 %v850
      %875 = vmatprep.subr.bf16.mxu0 0
      %876 = vmatpush1.bf16.msra.mxu0 0
      %877 = vmatprep.subr.bf16.mxu0 0
      %878 = vmatpush1.bf16.msra.mxu0 0
      %879 = vmatprep.subr.bf16.mxu0 0
      %880 = vmatpush1.bf16.msra.mxu0 0
      %881 = vmatprep.subr.bf16.mxu0 0
      %882 = vmatpush1.bf16.msra.mxu0 0
      %883 = vmatprep.subr.bf16.mxu0 0
      %884 = vmatpush1.bf16.msra.mxu0 0
      %885 = vmatprep.subr.bf16.mxu0 0
      %886 = vmatpush1.bf16.msra.mxu0 0
      %887 = vmatprep.subr.bf16.mxu0 0
      %888 = vmatpush1.bf16.msra.mxu0 0
      %889 = vmatprep.subr.bf16.mxu0 0
      %890 = vmatpush1.bf16.msra.mxu0 0
      %891 = vmatprep.mubr.bf16.mxu0 0
      %892 = vmatmul.mubr.bf16.gmra.mrb[0].mxu0 %v604
      %v893 = vpop.f32.mrb[0].mxu0
      %v894 = vadd.f32 %v805, %v893
      %v895 = vpop.f32.mrb[0].mxu0
      %v896 = vpop.f32.mrb[0].mxu0
      %v897 = vadd.f32 %v808, %v896
      %v898 = vpop.f32.mrb[0].mxu0
      %899 = vdwg.mxu0
      %s900 = scalar_lea.vmem %s3, 128
      %v901 = vld [vmem:[%s900] sm:$0xf]
      %v902 = vld [vmem:[%s900 + $0x4] sm:$0xf]
      %v903 = vld [vmem:[%s900 + $0x8] sm:$0xf]
      %v904 = vld [vmem:[%s900 + $0xc] sm:$0xf]
      %v905 = vld [vmem:[%s900 + $0x10] sm:$0xf]
      %v906 = vld [vmem:[%s900 + $0x14] sm:$0xf]
      %v907 = vld [vmem:[%s900 + $0x18] sm:$0xf]
      %v908 = vld [vmem:[%s900 + $0x1c] sm:$0xf]
      %v909 = vld [vmem:[%s900 + $0x20] sm:$0xf]
      %v910 = vld [vmem:[%s900 + $0x24] sm:$0xf]
      %v911 = vld [vmem:[%s900 + $0x28] sm:$0xf]
      %v912 = vld [vmem:[%s900 + $0x2c] sm:$0xf]
      %v913 = vld [vmem:[%s900 + $0x30] sm:$0xf]
      %v914 = vld [vmem:[%s900 + $0x34] sm:$0xf]
      %v915 = vld [vmem:[%s900 + $0x38] sm:$0xf]
      %v916 = vld [vmem:[%s900 + $0x3c] sm:$0xf]
      %v933 = vunpack.c.l.b16 %v901
      %v934 = vunpack.c.l.b16 %v902
      %v935 = vunpack.c.l.b16 %v903
      %v936 = vunpack.c.l.b16 %v904
      %v937 = vunpack.c.l.b16 %v905
      %v938 = vunpack.c.l.b16 %v906
      %v939 = vunpack.c.l.b16 %v907
      %v940 = vunpack.c.l.b16 %v908
      %v941 = vunpack.c.l.b16 %v909
      %v942 = vunpack.c.l.b16 %v910
      %v943 = vunpack.c.l.b16 %v911
      %v944 = vunpack.c.l.b16 %v912
      %v945 = vunpack.c.l.b16 %v913
      %v946 = vunpack.c.l.b16 %v914
      %v947 = vunpack.c.l.b16 %v915
      %v948 = vunpack.c.l.b16 %v916
      %v949 = vpack.c.b16 %v934, %v933
      %v950 = vpack.c.b16 %v936, %v935
      %v951 = vpack.c.b16 %v938, %v937
      %v952 = vpack.c.b16 %v940, %v939
      %v953 = vpack.c.b16 %v942, %v941
      %v954 = vpack.c.b16 %v944, %v943
      %v955 = vpack.c.b16 %v946, %v945
      %v956 = vpack.c.b16 %v948, %v947
      %965 = vmatprep.subr.bf16.mxu0 0
      %966 = vmatpush1.bf16.msra.mxu0 %v949
      %967 = vmatprep.subr.bf16.mxu0 0
      %968 = vmatpush1.bf16.msra.mxu0 %v950
      %969 = vmatprep.subr.bf16.mxu0 0
      %970 = vmatpush1.bf16.msra.mxu0 %v951
      %971 = vmatprep.subr.bf16.mxu0 0
      %972 = vmatpush1.bf16.msra.mxu0 %v952
      %973 = vmatprep.subr.bf16.mxu0 0
      %974 = vmatpush1.bf16.msra.mxu0 %v953
      %975 = vmatprep.subr.bf16.mxu0 0
      %976 = vmatpush1.bf16.msra.mxu0 %v954
      %977 = vmatprep.subr.bf16.mxu0 0
      %978 = vmatpush1.bf16.msra.mxu0 %v955
      %979 = vmatprep.subr.bf16.mxu0 0
      %980 = vmatpush1.bf16.msra.mxu0 %v956
      %981 = vmatprep.subr.bf16.mxu0 0
      %982 = vmatpush1.bf16.msra.mxu0 0
      %983 = vmatprep.subr.bf16.mxu0 0
      %984 = vmatpush1.bf16.msra.mxu0 0
      %985 = vmatprep.subr.bf16.mxu0 0
      %986 = vmatpush1.bf16.msra.mxu0 0
      %987 = vmatprep.subr.bf16.mxu0 0
      %988 = vmatpush1.bf16.msra.mxu0 0
      %989 = vmatprep.subr.bf16.mxu0 0
      %990 = vmatpush1.bf16.msra.mxu0 0
      %991 = vmatprep.subr.bf16.mxu0 0
      %992 = vmatpush1.bf16.msra.mxu0 0
      %993 = vmatprep.subr.bf16.mxu0 0
      %994 = vmatpush1.bf16.msra.mxu0 0
      %995 = vmatprep.subr.bf16.mxu0 0
      %996 = vmatpush1.bf16.msra.mxu0 0
      %997 = vmatprep.mubr.bf16.mxu0 0
      %998 = vmatmul.mubr.bf16.gmra.mrb[0].mxu0 %v688
      %v999 = vpop.f32.mrb[0].mxu0
      %v1000 = vadd.f32 0.0, %v999
      %v1001 = vpop.f32.mrb[0].mxu0
      %v1002 = vpop.f32.mrb[0].mxu0
      %v1003 = vadd.f32 0.0, %v1002
      %v1004 = vpop.f32.mrb[0].mxu0
      %1005 = vdwg.mxu0
      %v1006 = vadd.f32 %v894, %v1000
      %v1007 = vadd.f32 %v897, %v1003
      %v1008 = vld [vmem:[%s4] sm:$0xf]
      %v1009 = vld [vmem:[%s4 + $0x4] sm:$0xf]
      %v1010 = vld [vmem:[%s4 + $0x8] sm:$0xf]
      %v1011 = vld [vmem:[%s4 + $0xc] sm:$0xf]
      %v1012 = vld [vmem:[%s4 + $0x10] sm:$0xf]
      %v1013 = vld [vmem:[%s4 + $0x14] sm:$0xf]
      %v1014 = vld [vmem:[%s4 + $0x18] sm:$0xf]
      %v1015 = vld [vmem:[%s4 + $0x1c] sm:$0xf]
      %v1024 = vunpack.c.l.b16 %v1008
      %v1025 = vunpack.c.l.b16 %v1009
      %v1026 = vunpack.c.l.b16 %v1010
      %v1027 = vunpack.c.l.b16 %v1011
      %v1028 = vunpack.c.l.b16 %v1012
      %v1029 = vunpack.c.l.b16 %v1013
      %v1030 = vunpack.c.l.b16 %v1014
      %v1031 = vunpack.c.l.b16 %v1015
      %v1032 = vpack.c.b16 %v1025, %v1024
      %v1033 = vpack.c.b16 %v1027, %v1026
      %v1034 = vpack.c.b16 %v1029, %v1028
      %v1035 = vpack.c.b16 %v1031, %v1030
      %1040 = vmatprep.subr.bf16.mxu0 0
      %1041 = vmatpush1.bf16.msra.mxu0 %v1032
      %1042 = vmatprep.subr.bf16.mxu0 0
      %1043 = vmatpush1.bf16.msra.mxu0 %v1033
      %1044 = vmatprep.subr.bf16.mxu0 0
      %1045 = vmatpush1.bf16.msra.mxu0 %v1034
      %1046 = vmatprep.subr.bf16.mxu0 0
      %1047 = vmatpush1.bf16.msra.mxu0 %v1035
      %1048 = vmatprep.subr.bf16.mxu0 0
      %1049 = vmatpush1.bf16.msra.mxu0 0
      %1050 = vmatprep.subr.bf16.mxu0 0
      %1051 = vmatpush1.bf16.msra.mxu0 0
      %1052 = vmatprep.subr.bf16.mxu0 0
      %1053 = vmatpush1.bf16.msra.mxu0 0
      %1054 = vmatprep.subr.bf16.mxu0 0
      %1055 = vmatpush1.bf16.msra.mxu0 0
      %1056 = vmatprep.subr.bf16.mxu0 0
      %1057 = vmatpush1.bf16.msra.mxu0 0
      %1058 = vmatprep.subr.bf16.mxu0 0
      %1059 = vmatpush1.bf16.msra.mxu0 0
      %1060 = vmatprep.subr.bf16.mxu0 0
      %1061 = vmatpush1.bf16.msra.mxu0 0
      %1062 = vmatprep.subr.bf16.mxu0 0
      %1063 = vmatpush1.bf16.msra.mxu0 0
      %1064 = vmatprep.subr.bf16.mxu0 0
      %1065 = vmatpush1.bf16.msra.mxu0 0
      %1066 = vmatprep.subr.bf16.mxu0 0
      %1067 = vmatpush1.bf16.msra.mxu0 0
      %1068 = vmatprep.subr.bf16.mxu0 0
      %1069 = vmatpush1.bf16.msra.mxu0 0
      %1070 = vmatprep.subr.bf16.mxu0 0
      %1071 = vmatpush1.bf16.msra.mxu0 0
      %1072 = vmatprep.mubr.bf16.mxu0 0
      %1073 = vmatmul.mubr.bf16.gmra.mrb[0].mxu0 %v474
      %v1074 = vpop.f32.mrb[0].mxu0
      %v1075 = vadd.f32 0.0, %v1074
      %v1076 = vpop.f32.mrb[0].mxu0
      %v1077 = vpop.f32.mrb[0].mxu0
      %v1078 = vadd.f32 0.0, %v1077
      %v1079 = vpop.f32.mrb[0].mxu0
      %1080 = vdwg.mxu0
      %v1081 = vadd.f32 %v1006, %v1075
      %v1082 = vadd.f32 %v1007, %v1078
      %v1083 = vlaneseq
      %v1084 = vshrl.u32 %v1083, 7
      %v1085 = vsub.s32 1, %v1084
      %v1086 = vrot.slane %v256, %v1085
      %v1087 = vadd.f32 %v1081, %v1086
      %v1088 = vadd.f32 %v1082, %v1086
      %v1089 = vmax.f32 %v1087, 0.0
      %v1090 = vmax.f32 %v1088, 0.0
      %1091 = vst [vmem:[%s251] sm:$0xff] %v1089
      %1092 = vst [vmem:[%s251 + $0x8] sm:$0xff] %v1090
      %p1093 = scmp.lt.s32.totalorder %s17, 1
      %s1094 = scalar_select %p1093, %s17, 1
      %s1095 = smul.addr %s1094, 2
      %s1096 = smul.addr %s1095, 8
      %s1097 = scalar_lea.vmem %s6, %s1096
      // Predicated region
      $region45: #{resblock_pallas.1} parent=43 // pred_check
        %p1098 = pneg %p166
      $region46: #{resblock_pallas.1} parent=43 // pred_check_branch
        %1100 = sbr.rel (%p1098) target = $region48
      $region47: #{resblock_pallas.1} parent=43 // pred_region
        _
      $region48: #{resblock_pallas.1} parent=43 // pred_fallthru
        _
    $region44: #{resblock_pallas.1} parent=5 // pred_fallthru
      _
    %p1101 = scmp.le.s32.totalorder 2, %s12
    // Predicated region
    $region49: #{resblock_pallas.1} parent=5 // pred_check
      %p1102 = pneg %p1101
    $region50: #{resblock_pallas.1} parent=5 // pred_check_branch
      %1104 = sbr.rel (%p1102) target = $region52
    $region51: #{resblock_pallas.1} parent=5 // pred_region
      %s1105 = ssub.s32 %s12, 2
      // Predicated region
      $region53: #{resblock_pallas.1} parent=51 // pred_check
        %p1106 = pneg %p172
      $region54: #{resblock_pallas.1} parent=51 // pred_check_branch
        %1108 = sbr.rel (%p1106) target = $region56
      $region55: #{resblock_pallas.1} parent=51 // pred_region
        %p1109 = scmp.lt.s32.totalorder %s18, 1
        %s1110 = scalar_select %p1109, %s18, 1
        %s1111 = smul.addr %s1110, 2
        %s1112 = smul.addr %s1111, 8
        %s1113 = scalar_lea.vmem %s6, %s1112
      $region56: #{resblock_pallas.1} parent=51 // pred_fallthru
        _
    $region52: #{resblock_pallas.1} parent=5 // pred_fallthru
      _
  $region6: #{resblock_pallas.1} parent=0 // loop_footer
    %s16 = sadd.s32 1, %s12
  $region7: #{resblock_pallas.1} parent=0 // loop_footer_branch
    %11 = sbr.rel target = $region3
  $region8: #{resblock_pallas.1} parent=0 // loop_exit
    _

</llo_original>
